<compile_context>
chip_gen: v5e
topology: v5e:2x2
jax: 0.10.0
libtpu: 0.0.40
codegen_flags: <defaults>
</compile_context>

<pallas_src>
import numpy as np
import jax
import jax.numpy as jnp
from jax.experimental import pallas as pl
from jax.experimental.pallas import tpu as pltpu


def _round_up(x, m):
    return (x + m - 1) // m * m


# --------------------------------------------------------------------------
# Kernel: masking (VPU) + 3 lane-dense MXU matmuls
# --------------------------------------------------------------------------
def _assemble_kernel(u_ref, w_ref, m_ref, selT_ref, kbdT_ref, sel_ref, o_ref):
    """u/w/m/o: (1, P);  selT: (P, Q);  kbdT: (Q, Q);  sel: (Q, P).

    P = ndof padded to a multiple of 128, Q = NE*G padded to a multiple of 128.
    kbdT is the block-diagonal packing of the per-element K^T (padded blocks 0),
    sel[a, d] = 1 iff flattened elemental DOF a maps to global DOF d.
    """
    # u_torch1: weight * u on free DOFs, 0 on constrained / padded DOFs (VPU)
    u1 = jnp.where(m_ref[...] > 0.5, w_ref[...] * u_ref[...],
                   jnp.zeros_like(u_ref[...]))                        # (1, P)

    # gather: ue[e*G+g] = u1[ENdof[e, g]]        (contraction = P, RHS dim 0)
    ue = jnp.dot(u1, selT_ref[...], preferred_element_type=jnp.float32)   # (1, Q)

    # elemental matvec: gp[e*G+i] = (K_e @ u1[ENdof_e])[i]
    # Kbd is block-diagonal, so one (1,Q)@(Q,Q) matmul does all elements at once.
    gp = jnp.dot(ue, kbdT_ref[...], preferred_element_type=jnp.float32)   # (1, Q)

    # scatter-add: Global_F[d] = sum_{e,g} gp[e*G+g] * sel[e*G+g, d]
    o_ref[...] = jnp.dot(gp, sel_ref[...], preferred_element_type=jnp.float32)


# --------------------------------------------------------------------------
# Wrapper: static (mesh-dependent) operand precompute + per-call forward
# --------------------------------------------------------------------------
def make_static_operands(K, endof, ndof):
    """Precompute sel^T, block-diagonal K^T and sel once (static mesh data)."""
    NE, G, _ = K.shape
    P = _round_up(ndof, 128)            # lane-dense global-DOF axis
    Q = _round_up(NE * G, 128)          # lane-dense flattened elemental-DOF axis

    # one-hot selection matrix (padded rows stay zero -> contribute nothing)
    sel = jax.nn.one_hot(jnp.asarray(endof, jnp.int32).reshape(NE * G), P,
                         dtype=jnp.float32)                            # (NE*G, P)
    sel_flat = jnp.zeros((Q, P), jnp.float32).at[:NE * G].set(sel)     # (Q, P)
    sel_T = sel_flat.T                                                 # (P, Q)

    # block-diagonal K^T: kbdT[e*G+j, e*G+i] = K[e, i, j]   (padded blocks = 0)
    r = np.arange(NE)[:, None, None] * G + np.arange(G)[None, :, None]   # (NE,G,1)
    c = np.arange(NE)[:, None, None] * G + np.arange(G)[None, None, :]   # (NE,1,G)
    kbdT = jnp.zeros((Q, Q), jnp.float32).at[r, c].set(
        jnp.swapaxes(jnp.asarray(K, jnp.float32), 1, 2))               # (Q, Q)
    return sel_T, kbdT, sel_flat, P, Q


def nnmodel3_forward(u, w_full, free_mask, sel_T, kbdT, sel_flat, P, Q, ndof):
    """u, w_full, free_mask: (ndof,) f32 -> Global_F: (ndof,) f32."""
    u_p = jnp.zeros((1, P), jnp.float32).at[0, :ndof].set(u)
    w_p = jnp.zeros((1, P), jnp.float32).at[0, :ndof].set(w_full)
    m_p = jnp.zeros((1, P), jnp.float32).at[0, :ndof].set(free_mask)

    cost = pl.CostEstimate(
        flops=2 * (P * Q + Q * Q + Q * P),
        transcendentals=0,
        bytes_accessed=4 * (3 * P + P * Q + Q * Q + Q * P + P),
    )
    vmem = pl.BlockSpec(memory_space=pltpu.MemorySpace.VMEM)

    out = pl.pallas_call(
        _assemble_kernel,
        out_shape=jax.ShapeDtypeStruct((1, P), jnp.float32),
        in_specs=[vmem, vmem, vmem, vmem, vmem, vmem],
        out_specs=vmem,
        cost_estimate=cost,
    )(u_p, w_p, m_p, sel_T, kbdT, sel_flat)
    return out[0, :ndof]


# --------------------------------------------------------------------------
# Problem / parameter setup (mirrors Fem / Node / Element from the module)
# --------------------------------------------------------------------------
def constitutive_law(lamda, mu):
    # Computed for fidelity with the reference forward; its result (D) is never
    # used in Global_F, so it stays plain numpy glue.
    tmp1 = np.zeros([3, 3])
    tmp1[0, 0] = tmp1[0, 1] = tmp1[1, 0] = tmp1[1, 1] = 1.0
    tmp2 = np.zeros([3, 3])
    tmp2[0, 0] = tmp2[1, 1] = 2.0
    tmp2[2, 2] = 1.0
    return tmp1 * lamda + tmp2 * mu


def elemental_node_dof(edof):
    tmp1 = np.array(edof) * 2 - 2
    tmp2 = np.array(edof) * 2 - 1
    c = np.empty(tmp1.size * 2, dtype=tmp1.dtype)
    c[0::2] = tmp1
    c[1::2] = tmp2
    return c


def build_mesh(nx=3, ny=3):
    """Structured quad mesh, 1-based connectivity (4 nodes / element)."""
    nnx, nny = nx + 1, ny + 1
    conn = []
    for j in range(ny):
        for i in range(nx):
            n1 = j * nnx + i + 1
            conn.append([n1, n1 + 1, n1 + 1 + nnx, n1 + nnx])
    nnode = nnx * nny
    return np.array(conn, dtype=np.int64), nnode, nnx


def reference_forward(weight1, u, bc_e, K_np, endof_np, ndof_tot):
    idx_free = np.where(np.isnan(bc_e))[0]
    u1 = np.zeros(ndof_tot, dtype=np.float64)
    u1[idx_free] = np.asarray(weight1, np.float64) * np.asarray(u, np.float64)[idx_free]
    gf = np.zeros(ndof_tot, dtype=np.float64)
    for e in range(K_np.shape[0]):
        en = endof_np[e]
        gp = np.asarray(K_np[e], np.float64) @ u1[en]
        gf[en] += gp
    return gf.astype(np.float32)


if __name__ == "__main__":
    dim = 2
    conn, nnode, nnx = build_mesh(3, 3)          # 9 quad elements, 16 nodes
    NE = conn.shape[0]
    G = dim * conn.shape[1]                      # 8 DOFs per element
    ndof_tot = nnode * dim                       # 32 global DOFs

    # Boundary conditions: clamp both DOFs of the left-edge nodes, rest free (NaN)
    bc_e = np.full(ndof_tot, np.nan, dtype=np.float64)
    left_nodes = np.arange(0, nnode, nnx)        # 0-based node ids on x = 0
    for n in left_nodes:
        bc_e[2 * n] = 0.0
        bc_e[2 * n + 1] = 0.0
    idx_free = np.where(np.isnan(bc_e))[0]
    ndof_free = idx_free.size                    # 24 -> weight1 length

    _ = constitutive_law(lamda=1.0, mu=0.5)      # D is computed but unused downstream

    # element DOF maps (interleaved x/y DOFs, 0-based)
    endof_np = np.stack([elemental_node_dof(e) for e in conn]).astype(np.int32)

    # deterministic parameters / inputs
    key = jax.random.PRNGKey(0)
    k_w, k_u, k_k = jax.random.split(key, 3)
    weight1 = jax.random.normal(k_w, (ndof_free,), dtype=jnp.float32)
    u_node = jax.random.normal(k_u, (ndof_tot,), dtype=jnp.float32)
    K_raw = jax.random.normal(k_k, (NE, G, G), dtype=jnp.float32)
    K_elem = 0.5 * (K_raw + jnp.swapaxes(K_raw, 1, 2))   # symmetric "stiffness"

    # scatter weight1 into a full-length DOF vector; free-DOF mask (glue)
    w_full = jnp.zeros((ndof_tot,), jnp.float32).at[jnp.asarray(idx_free)].set(weight1)
    free_mask = jnp.asarray(np.isnan(bc_e).astype(np.float32))

    # static operands (connectivity + stiffness are fixed mesh data)
    sel_T, kbdT, sel_flat, P, Q = make_static_operands(K_elem, endof_np, ndof_tot)

    global_f = nnmodel3_forward(u_node, w_full, free_mask,
                                sel_T, kbdT, sel_flat, P, Q, ndof_tot)
    global_f = jax.block_until_ready(global_f)

    ref = reference_forward(np.asarray(weight1), np.asarray(u_node), bc_e,
                            np.asarray(K_elem), endof_np, ndof_tot)
    np.testing.assert_allclose(np.asarray(global_f), ref, rtol=1e-5, atol=1e-5)
    print("KERNEL_OK")
</pallas_src>

<mosaic_0001>
module attributes {stable_mosaic.version = 11 : i64} {
  func.func @_assemble_kernel(%arg0: memref<1x128xf32, #tpu.memory_space<vmem>>, %arg1: memref<1x128xf32, #tpu.memory_space<vmem>>, %arg2: memref<1x128xf32, #tpu.memory_space<vmem>>, %arg3: memref<128x128xf32, #tpu.memory_space<vmem>>, %arg4: memref<128x128xf32, #tpu.memory_space<vmem>>, %arg5: memref<128x128xf32, #tpu.memory_space<vmem>>, %arg6: memref<1x128xf32, #tpu.memory_space<vmem>>) attributes {dimension_semantics = [], scalar_prefetch = 0 : i64, scratch_operands = 0 : i64, tpu.core_type = #tpu.core_type<tc>} {
    %c0 = arith.constant 0 : index
    %c0_0 = arith.constant 0 : index
    %0 = vector.load %arg2[%c0, %c0_0] : memref<1x128xf32, #tpu.memory_space<vmem>>, vector<1x128xf32>
    %cst = arith.constant 5.000000e-01 : f32
    %1 = vector.broadcast %cst : f32 to vector<1x128xf32>
    %2 = arith.cmpf ogt, %0, %1 : vector<1x128xf32>
    %c0_1 = arith.constant 0 : index
    %c0_2 = arith.constant 0 : index
    %3 = vector.load %arg1[%c0_1, %c0_2] : memref<1x128xf32, #tpu.memory_space<vmem>>, vector<1x128xf32>
    %c0_3 = arith.constant 0 : index
    %c0_4 = arith.constant 0 : index
    %4 = vector.load %arg0[%c0_3, %c0_4] : memref<1x128xf32, #tpu.memory_space<vmem>>, vector<1x128xf32>
    %5 = arith.mulf %3, %4 : vector<1x128xf32>
    %cst_5 = arith.constant 0.000000e+00 : f32
    %6 = vector.broadcast %cst_5 : f32 to vector<1x128xf32>
    %7 = arith.select %2, %5, %6 : vector<1x128xi1>, vector<1x128xf32>
    %c0_6 = arith.constant 0 : index
    %c0_7 = arith.constant 0 : index
    %8 = vector.load %arg3[%c0_6, %c0_7] : memref<128x128xf32, #tpu.memory_space<vmem>>, vector<128x128xf32>
    %cst_8 = arith.constant dense<0.000000e+00> : vector<1x128xf32>
    %9 = tpu.matmul %7, %8, %cst_8 {dimension_numbers = #tpu.dot_dimension_numbers<[1], [0], [0], [1], [0, 0, 1, 1], [], []>} : vector<1x128xf32>, vector<128x128xf32>, vector<1x128xf32> -> vector<1x128xf32>
    %c0_9 = arith.constant 0 : index
    %c0_10 = arith.constant 0 : index
    %10 = vector.load %arg4[%c0_9, %c0_10] : memref<128x128xf32, #tpu.memory_space<vmem>>, vector<128x128xf32>
    %cst_11 = arith.constant dense<0.000000e+00> : vector<1x128xf32>
    %11 = tpu.matmul %9, %10, %cst_11 {dimension_numbers = #tpu.dot_dimension_numbers<[1], [0], [0], [1], [0, 0, 1, 1], [], []>} : vector<1x128xf32>, vector<128x128xf32>, vector<1x128xf32> -> vector<1x128xf32>
    %c0_12 = arith.constant 0 : index
    %c0_13 = arith.constant 0 : index
    %12 = vector.load %arg5[%c0_12, %c0_13] : memref<128x128xf32, #tpu.memory_space<vmem>>, vector<128x128xf32>
    %cst_14 = arith.constant dense<0.000000e+00> : vector<1x128xf32>
    %13 = tpu.matmul %11, %12, %cst_14 {dimension_numbers = #tpu.dot_dimension_numbers<[1], [0], [0], [1], [0, 0, 1, 1], [], []>} : vector<1x128xf32>, vector<128x128xf32>, vector<1x128xf32> -> vector<1x128xf32>
    %c0_15 = arith.constant 0 : index
    %c0_16 = arith.constant 0 : index
    %14 = vector.load %arg6[%c0_15, %c0_16] : memref<1x128xf32, #tpu.memory_space<vmem>>, vector<1x128xf32>
    tpu.vector_store %arg6[%c0_15, %c0_16], %13 {strides = array<i32>} : memref<1x128xf32, #tpu.memory_space<vmem>>, vector<1x128xf32>,
    return
  }
}

</mosaic_0001>

<llo_original>
// kernel: tpu_custom_call.1
$region0: #{tpu_custom_call.1}
  #allocation0 [shape = 'u32[]', space=smem, size = 0x4, offset = 0x4, fixed_abs, tag = 'smem constant byte address 0x4 - core index']
  #allocation1 [shape = 'u32[72,128]{1,0:T(1,128)}', space=vmem, size = 0x9000, scoped, tag = 'internal scratch']
  %s0 = inlined_call_operand.hbm [shape: f32[1,128], index: 0, kind: input, shape index: {}]
  %s1 = inlined_call_operand.hbm [shape: f32[1,128], index: 1, kind: input, shape index: {}]
  %s2 = inlined_call_operand.vmem [shape: f32[1,128], index: 2, kind: input, shape index: {}]
  %s3 = inlined_call_operand.hbm [shape: f32[128,128], index: 3, kind: input, shape index: {}]
  %s4 = inlined_call_operand.hbm [shape: f32[128,128], index: 4, kind: input, shape index: {}]
  %s5 = inlined_call_operand.hbm [shape: f32[128,128], index: 5, kind: input, shape index: {}]
  %s6 = inlined_call_operand.hbm [shape: f32[1,128], index: 6, kind: output, shape index: {}]
  %s7 = sld [smem:[#allocation0]]
  $region54: #{tpu_custom_call.1} parent=0
    _
  %s9 = ssub.s32 1, %s7
  %s10 = scalar_select 0, %s9, %s7
  $region1: #{tpu_custom_call.1} parent=0
    #allocation2 [shape = 'u8[512]{0}', space=vmem, size = 0x400, scoped, tag = 'input window, operand 0, single buffered']
    #allocation3 [shape = 's32[1]{0}', space=sflag, size = 0x4, scoped, tag = 'scoped memory for tpu_custom_call.1']
    #allocation4 [shape = 's32[1]{0}', space=sflag, size = 0x4, scoped, tag = 'scoped memory for tpu_custom_call.1']
    #allocation5 [shape = 'u8[512]{0}', space=vmem, size = 0x400, scoped, tag = 'input window, operand 1, single buffered']
    #allocation6 [shape = 's32[1]{0}', space=sflag, size = 0x4, scoped, tag = 'scoped memory for tpu_custom_call.1']
    #allocation7 [shape = 'u8[65536]{0}', space=vmem, size = 0x10000, scoped, tag = 'input window, operand 3, single buffered']
    #allocation8 [shape = 'u8[65536]{0}', space=vmem, size = 0x10000, scoped, tag = 'input window, operand 4, single buffered']
    #allocation9 [shape = 's32[1]{0}', space=sflag, size = 0x4, scoped, tag = 'scoped memory for tpu_custom_call.1']
    #allocation10 [shape = 'u8[65536]{0}', space=vmem, size = 0x10000, scoped, tag = 'input window, operand 5, single buffered']
    #allocation11 [shape = 'u8[512]{0}', space=vmem, size = 0x400, scoped, tag = 'output window, operand 0, single buffered']
    %11 = vsyncpa [#allocation3], 0
    %12 = vsyncpa [#allocation6], 0
    %13 = vsyncpa [#allocation9], 0
    %14 = vsyncpa [#allocation4], 0
    // Predicated region
    $region2: #{tpu_custom_call.1} parent=1 // pred_check
      _
    $region3: #{tpu_custom_call.1} parent=1 // pred_check_branch
      %16 = sbr.rel (0) target = $region5
    $region4: #{tpu_custom_call.1} parent=1 // pred_region
      %18 = vsyncadd [#allocation3], 0
      %s20 = sshll.u32 %s0, 4
      %s21 = int_to_ptr.hbm [resolvable:$true] %s20
      %s22 = sshll.u32 [#allocation2], 4
      %s23 = int_to_ptr.vmem [resolvable:$true] %s22
      %25 = dma.hbm_to_vmem [thread:$0]  %s21, 16, %s23, [#allocation3]
    $region5: #{tpu_custom_call.1} parent=1 // pred_fallthru
      _
    // Predicated region
    $region6: #{tpu_custom_call.1} parent=1 // pred_check
      _
    $region7: #{tpu_custom_call.1} parent=1 // pred_check_branch
      %27 = sbr.rel (0) target = $region9
    $region8: #{tpu_custom_call.1} parent=1 // pred_region
      %29 = vsyncadd [#allocation6], 0
      %s31 = sshll.u32 %s1, 4
      %s32 = int_to_ptr.hbm [resolvable:$true] %s31
      %s33 = sshll.u32 [#allocation5], 4
      %s34 = int_to_ptr.vmem [resolvable:$true] %s33
      %36 = dma.hbm_to_vmem [thread:$0]  %s32, 16, %s34, [#allocation6]
    $region9: #{tpu_custom_call.1} parent=1 // pred_fallthru
      _
    // Predicated region
    $region10: #{tpu_custom_call.1} parent=1 // pred_check
      _
    $region11: #{tpu_custom_call.1} parent=1 // pred_check_branch
      %38 = sbr.rel (0) target = $region13
    $region12: #{tpu_custom_call.1} parent=1 // pred_region
      _
    $region13: #{tpu_custom_call.1} parent=1 // pred_fallthru
      _
    // Predicated region
    $region14: #{tpu_custom_call.1} parent=1 // pred_check
      _
    $region15: #{tpu_custom_call.1} parent=1 // pred_check_branch
      %40 = sbr.rel (0) target = $region17
    $region16: #{tpu_custom_call.1} parent=1 // pred_region
      %42 = vsyncadd [#allocation6], 0
      %s43 = sshll.u32 %s3, 4
      %s44 = int_to_ptr.hbm [resolvable:$true] %s43
      %s45 = sshll.u32 [#allocation7], 4
      %s46 = int_to_ptr.vmem [resolvable:$true] %s45
      %51 = dma.hbm_to_vmem [thread:$0]  %s44, 2048, %s46, [#allocation6], 128, 128, 8
    $region17: #{tpu_custom_call.1} parent=1 // pred_fallthru
      _
    // Predicated region
    $region18: #{tpu_custom_call.1} parent=1 // pred_check
      _
    $region19: #{tpu_custom_call.1} parent=1 // pred_check_branch
      %53 = sbr.rel (0) target = $region21
    $region20: #{tpu_custom_call.1} parent=1 // pred_region
      %55 = vsyncadd [#allocation9], 0
      %s56 = sshll.u32 %s4, 4
      %s57 = int_to_ptr.hbm [resolvable:$true] %s56
      %s58 = sshll.u32 [#allocation8], 4
      %s59 = int_to_ptr.vmem [resolvable:$true] %s58
      %64 = dma.hbm_to_vmem [thread:$0]  %s57, 2048, %s59, [#allocation9], 128, 128, 8
    $region21: #{tpu_custom_call.1} parent=1 // pred_fallthru
      _
    // Predicated region
    $region22: #{tpu_custom_call.1} parent=1 // pred_check
      _
    $region23: #{tpu_custom_call.1} parent=1 // pred_check_branch
      %66 = sbr.rel (0) target = $region25
    $region24: #{tpu_custom_call.1} parent=1 // pred_region
      %68 = vsyncadd [#allocation9], 0
      %s69 = sshll.u32 %s5, 4
      %s70 = int_to_ptr.hbm [resolvable:$true] %s69
      %s71 = sshll.u32 [#allocation10], 4
      %s72 = int_to_ptr.vmem [resolvable:$true] %s71
      %77 = dma.hbm_to_vmem [thread:$0]  %s70, 2048, %s72, [#allocation9], 128, 128, 8
    $region25: #{tpu_custom_call.1} parent=1 // pred_fallthru
      _
    // Predicated region
    $region26: #{tpu_custom_call.1} parent=1 // pred_check
      _
    $region27: #{tpu_custom_call.1} parent=1 // pred_check_branch
      %79 = sbr.rel (0) target = $region29
    $region28: #{tpu_custom_call.1} parent=1 // pred_region
      %81 = dma.done [#allocation3], 16
    $region29: #{tpu_custom_call.1} parent=1 // pred_fallthru
      _
    // Predicated region
    $region30: #{tpu_custom_call.1} parent=1 // pred_check
      _
    $region31: #{tpu_custom_call.1} parent=1 // pred_check_branch
      %83 = sbr.rel (0) target = $region33
    $region32: #{tpu_custom_call.1} parent=1 // pred_region
      %85 = dma.done [#allocation6], 16
    $region33: #{tpu_custom_call.1} parent=1 // pred_fallthru
      _
    // Predicated region
    $region34: #{tpu_custom_call.1} parent=1 // pred_check
      _
    $region35: #{tpu_custom_call.1} parent=1 // pred_check_branch
      %87 = sbr.rel (0) target = $region37
    $region36: #{tpu_custom_call.1} parent=1 // pred_region
      %89 = dma.done [#allocation6], 2048
    $region37: #{tpu_custom_call.1} parent=1 // pred_fallthru
      _
    // Predicated region
    $region38: #{tpu_custom_call.1} parent=1 // pred_check
      _
    $region39: #{tpu_custom_call.1} parent=1 // pred_check_branch
      %91 = sbr.rel (0) target = $region41
    $region40: #{tpu_custom_call.1} parent=1 // pred_region
      %93 = dma.done [#allocation9], 2048
    $region41: #{tpu_custom_call.1} parent=1 // pred_fallthru
      _
    // Predicated region
    $region42: #{tpu_custom_call.1} parent=1 // pred_check
      _
    $region43: #{tpu_custom_call.1} parent=1 // pred_check_branch
      %95 = sbr.rel (0) target = $region45
    $region44: #{tpu_custom_call.1} parent=1 // pred_region
      %97 = dma.done [#allocation9], 2048
    $region45: #{tpu_custom_call.1} parent=1 // pred_fallthru
      _
    %v98 = vld [vmem:[%s2] sm:$0x1]
    %vm99 = vcmp.gt.f32.partialorder %v98, 0.5
    %v100 = vld [vmem:[#allocation5] sm:$0x1]
    %v101 = vld [vmem:[#allocation2] sm:$0x1]
    %v102 = vmul.f32 %v100, %v101
    %v103 = vsel %vm99, %v102, 0.0
    %v104 = vld [vmem:[#allocation7] sm:$0xff]
    %v105 = vld [vmem:[#allocation7 + $0x8] sm:$0xff]
    %v106 = vld [vmem:[#allocation7 + $0x10] sm:$0xff]
    %v107 = vld [vmem:[#allocation7 + $0x18] sm:$0xff]
    %v108 = vld [vmem:[#allocation7 + $0x20] sm:$0xff]
    %v109 = vld [vmem:[#allocation7 + $0x28] sm:$0xff]
    %v110 = vld [vmem:[#allocation7 + $0x30] sm:$0xff]
    %v111 = vld [vmem:[#allocation7 + $0x38] sm:$0xff]
    %v112 = vld [vmem:[#allocation7 + $0x40] sm:$0xff]
    %v113 = vld [vmem:[#allocation7 + $0x48] sm:$0xff]
    %v114 = vld [vmem:[#allocation7 + $0x50] sm:$0xff]
    %v115 = vld [vmem:[#allocation7 + $0x58] sm:$0xff]
    %v116 = vld [vmem:[#allocation7 + $0x60] sm:$0xff]
    %v117 = vld [vmem:[#allocation7 + $0x68] sm:$0xff]
    %v118 = vld [vmem:[#allocation7 + $0x70] sm:$0xff]
    %v119 = vld [vmem:[#allocation7 + $0x78] sm:$0xff]
    %120 = vmatpush.msra.mxu0 %v119
    %121 = vmatpush.msra.mxu0 %v118
    %122 = vmatpush.msra.mxu0 %v117
    %123 = vmatpush.msra.mxu0 %v116
    %124 = vmatpush.msra.mxu0 %v115
    %125 = vmatpush.msra.mxu0 %v114
    %126 = vmatpush.msra.mxu0 %v113
    %127 = vmatpush.msra.mxu0 %v112
    %128 = vmatpush.msra.mxu0 %v111
    %129 = vmatpush.msra.mxu0 %v110
    %130 = vmatpush.msra.mxu0 %v109
    %131 = vmatpush.msra.mxu0 %v108
    %132 = vmatpush.msra.mxu0 %v107
    %133 = vmatpush.msra.mxu0 %v106
    %134 = vmatpush.msra.mxu0 %v105
    %135 = vmatpush.msra.mxu0 %v104
    %136 = vmatmul.f32.gmra.mxu0 %v103
    %v137 = vpop.f32.mrf.mxu0
    %v138 = vadd.f32 0.0, %v137
    %139 = vdwg.mxu0
    %v140 = vld [vmem:[#allocation8] sm:$0xff]
    %v141 = vld [vmem:[#allocation8 + $0x8] sm:$0xff]
    %v142 = vld [vmem:[#allocation8 + $0x10] sm:$0xff]
    %v143 = vld [vmem:[#allocation8 + $0x18] sm:$0xff]
    %v144 = vld [vmem:[#allocation8 + $0x20] sm:$0xff]
    %v145 = vld [vmem:[#allocation8 + $0x28] sm:$0xff]
    %v146 = vld [vmem:[#allocation8 + $0x30] sm:$0xff]
    %v147 = vld [vmem:[#allocation8 + $0x38] sm:$0xff]
    %v148 = vld [vmem:[#allocation8 + $0x40] sm:$0xff]
    %v149 = vld [vmem:[#allocation8 + $0x48] sm:$0xff]
    %v150 = vld [vmem:[#allocation8 + $0x50] sm:$0xff]
    %v151 = vld [vmem:[#allocation8 + $0x58] sm:$0xff]
    %v152 = vld [vmem:[#allocation8 + $0x60] sm:$0xff]
    %v153 = vld [vmem:[#allocation8 + $0x68] sm:$0xff]
    %v154 = vld [vmem:[#allocation8 + $0x70] sm:$0xff]
    %v155 = vld [vmem:[#allocation8 + $0x78] sm:$0xff]
    %156 = vmatpush.msra.mxu0 %v155
    %157 = vmatpush.msra.mxu0 %v154
    %158 = vmatpush.msra.mxu0 %v153
    %159 = vmatpush.msra.mxu0 %v152
    %160 = vmatpush.msra.mxu0 %v151
    %161 = vmatpush.msra.mxu0 %v150
    %162 = vmatpush.msra.mxu0 %v149
    %163 = vmatpush.msra.mxu0 %v148
    %164 = vmatpush.msra.mxu0 %v147
    %165 = vmatpush.msra.mxu0 %v146
    %166 = vmatpush.msra.mxu0 %v145
    %167 = vmatpush.msra.mxu0 %v144
    %168 = vmatpush.msra.mxu0 %v143
    %169 = vmatpush.msra.mxu0 %v142
    %170 = vmatpush.msra.mxu0 %v141
    %171 = vmatpush.msra.mxu0 %v140
    %172 = vmatmul.f32.gmra.mxu0 %v138
    %v173 = vpop.f32.mrf.mxu0
    %v174 = vadd.f32 0.0, %v173
    %175 = vdwg.mxu0
    %v176 = vld [vmem:[#allocation10] sm:$0xff]
    %v177 = vld [vmem:[#allocation10 + $0x8] sm:$0xff]
    %v178 = vld [vmem:[#allocation10 + $0x10] sm:$0xff]
    %v179 = vld [vmem:[#allocation10 + $0x18] sm:$0xff]
    %v180 = vld [vmem:[#allocation10 + $0x20] sm:$0xff]
    %v181 = vld [vmem:[#allocation10 + $0x28] sm:$0xff]
    %v182 = vld [vmem:[#allocation10 + $0x30] sm:$0xff]
    %v183 = vld [vmem:[#allocation10 + $0x38] sm:$0xff]
    %v184 = vld [vmem:[#allocation10 + $0x40] sm:$0xff]
    %v185 = vld [vmem:[#allocation10 + $0x48] sm:$0xff]
    %v186 = vld [vmem:[#allocation10 + $0x50] sm:$0xff]
    %v187 = vld [vmem:[#allocation10 + $0x58] sm:$0xff]
    %v188 = vld [vmem:[#allocation10 + $0x60] sm:$0xff]
    %v189 = vld [vmem:[#allocation10 + $0x68] sm:$0xff]
    %v190 = vld [vmem:[#allocation10 + $0x70] sm:$0xff]
    %v191 = vld [vmem:[#allocation10 + $0x78] sm:$0xff]
    %192 = vmatpush.msra.mxu0 %v191
    %193 = vmatpush.msra.mxu0 %v190
    %194 = vmatpush.msra.mxu0 %v189
    %195 = vmatpush.msra.mxu0 %v188
    %196 = vmatpush.msra.mxu0 %v187
    %197 = vmatpush.msra.mxu0 %v186
    %198 = vmatpush.msra.mxu0 %v185
    %199 = vmatpush.msra.mxu0 %v184
    %200 = vmatpush.msra.mxu0 %v183
    %201 = vmatpush.msra.mxu0 %v182
    %202 = vmatpush.msra.mxu0 %v181
    %203 = vmatpush.msra.mxu0 %v180
    %204 = vmatpush.msra.mxu0 %v179
    %205 = vmatpush.msra.mxu0 %v178
    %206 = vmatpush.msra.mxu0 %v177
    %207 = vmatpush.msra.mxu0 %v176
    %208 = vmatmul.f32.gmra.mxu0 %v174
    %v209 = vpop.f32.mrf.mxu0
    %v210 = vadd.f32 0.0, %v209
    %211 = vdwg.mxu0
    %212 = vst [vmem:[#allocation11] sm:$0x1] %v210
    // Predicated region
    $region46: #{tpu_custom_call.1} parent=1 // pred_check
      _
    $region47: #{tpu_custom_call.1} parent=1 // pred_check_branch
      %214 = sbr.rel (0) target = $region49
    $region48: #{tpu_custom_call.1} parent=1 // pred_region
      %216 = vsyncadd [#allocation4], 0
      %s218 = sshll.u32 [#allocation11], 4
      %s219 = int_to_ptr.vmem [resolvable:$true] %s218
      %s220 = sshll.u32 %s6, 4
      %s221 = int_to_ptr.hbm [resolvable:$true] %s220
      %223 = dma.vmem_to_hbm [thread:$0]  %s219, 16, %s221, [#allocation4]
    $region49: #{tpu_custom_call.1} parent=1 // pred_fallthru
      _
    // Predicated region
    $region50: #{tpu_custom_call.1} parent=1 // pred_check
      _
    $region51: #{tpu_custom_call.1} parent=1 // pred_check_branch
      %225 = sbr.rel (0) target = $region53
    $region52: #{tpu_custom_call.1} parent=1 // pred_region
      %227 = dma.done [#allocation4], 16
    $region53: #{tpu_custom_call.1} parent=1 // pred_fallthru
      _
    %228 = vsyncpa [#allocation3], 1
    %229 = vsyncpa [#allocation6], 1
    %230 = vsyncpa [#allocation9], 1
    %231 = vsyncpa [#allocation4], 1

</llo_original>
